<compile_context>
chip_gen: v7x
topology: tpu7x:2x2x1
jax: 0.10.0
libtpu: 0.0.40
codegen_flags: <defaults>
</compile_context>

<pallas_src>
import jax
import jax.numpy as jnp
from jax import lax
from jax.experimental import pallas as pl
from jax.experimental.pallas import tpu as pltpu

# ----------------------------- model dims -----------------------------------
B = 2            # batch
S = 8            # sequence length
BS = B * S
H = 32           # hidden size
F = 64           # FFN intermediate
G = 6            # num_goals
VOCAB = 30
VOCAB_PAD = 32   # pad vocab so the one-hot matmul K-dim is a clean multiple of 8
LANES = 128
LN_EPS = 1e-12

# ---- row offsets inside the bf16 weight slab [W_ROWS, 128] ------------------
R_WEMB, R_WQ, R_WK, R_WV, R_WO = 0, 32, 64, 96, 128
R_W1, R_W2, R_RW1, R_RW2 = 160, 192, 256, 288
W_ROWS = 320

# ---- row offsets inside the f32 param slab [F_ROWS, 128] --------------------
R_POS, R_XMASK = 0, 16
(R_LN0G, R_LN0B, R_BQ, R_BK, R_BV, R_BO, R_LN1G, R_LN1B,
 R_C1, R_C2, R_LN2G, R_LN2B, R_RB1, R_RB2) = range(32, 46)
F_ROWS = 48


# ------------------------- single fused forward kernel -----------------------
def fused_bert_to_goal_kernel(
    ids_ref,    # [BS, 1]        int32  token ids (flattened batch*seq)
    mask_ref,   # [1, BS]        f32    attention mask (1 = keep), flattened
    fslab_ref,  # [F_ROWS, 128]  f32    pos-emb | block-diag bias | LN/bias rows
    wslab_ref,  # [W_ROWS, 128]  bf16   word-emb + all matmul weights
    out_ref,    # [B, 128]       f32    lane-dense goal values (first G valid)
):
    def prow(row, width=H):                       # [1, width] f32 param row
        return fslab_ref[row:row + 1, 0:width]

    def mm(a_f32, row, k, n):                     # bf16 MXU matmul, f32 accum
        return jnp.dot(a_f32.astype(jnp.bfloat16), wslab_ref[row:row + k, 0:n],
                       preferred_element_type=jnp.float32)

    def layernorm(h, g_row, b_row):
        mu = jnp.mean(h, axis=-1, keepdims=True)
        var = jnp.mean((h - mu) ** 2, axis=-1, keepdims=True)
        return (h - mu) * lax.rsqrt(var + LN_EPS) * prow(g_row) + prow(b_row)

    # ---- embedding lookup (one-hot matmul, exact in bf16) + positional add --
    ids = ids_ref[...]                                            # [BS, 1]
    onehot = (ids == lax.broadcasted_iota(jnp.int32, (BS, VOCAB_PAD), 1)
              ).astype(jnp.float32)                               # [BS, VOCAB_PAD]
    x = mm(onehot, R_WEMB, VOCAB_PAD, H) + fslab_ref[R_POS:R_POS + BS, 0:H]
    x = layernorm(x, R_LN0G, R_LN0B)                              # [BS, H]

    # ---- single-head self-attention: one block-diagonal [BS,BS] pass --------
    q = mm(x, R_WQ, H, H) + prow(R_BQ)
    k = mm(x, R_WK, H, H) + prow(R_BK)
    v = mm(x, R_WV, H, H) + prow(R_BV)

    keep = mask_ref[...]                                          # [1, BS]
    bias = fslab_ref[R_XMASK:R_XMASK + BS, 0:BS] + (keep - 1.0) * 1e9

    scale = jnp.float32(1.0 / (H ** 0.5))
    scores = lax.dot_general(
        q.astype(jnp.bfloat16), k.astype(jnp.bfloat16),
        dimension_numbers=(((1,), (1,)), ((), ())),
        preferred_element_type=jnp.float32) * scale + bias        # [BS, BS]
    m = jnp.max(scores, axis=-1, keepdims=True)
    p = jnp.exp(scores - m)
    p = p * pl.reciprocal(jnp.sum(p, axis=-1, keepdims=True), approx=True)
    ctx = jnp.dot(p.astype(jnp.bfloat16), v.astype(jnp.bfloat16),
                  preferred_element_type=jnp.float32)             # [BS, H]

    attn = mm(ctx, R_WO, H, H) + prow(R_BO)
    h1 = layernorm(x + attn, R_LN1G, R_LN1B)

    # ---- feed-forward --------------------------------------------------------
    # TODO(synk): tanh-approx GELU; torch.nn.GELU default is the exact erf form.
    ff = jax.nn.gelu(mm(h1, R_W1, H, F) + prow(R_C1, F))
    ff = mm(ff, R_W2, F, H) + prow(R_C2)
    h2 = layernorm(h1 + ff, R_LN2G, R_LN2B)

    # ---- regressor on ALL rows (lane-dense, no CLS gather/concat) ------------
    r1 = jax.nn.gelu(mm(h2, R_RW1, H, H) + prow(R_RB1))
    goals = mm(r1, R_RW2, H, LANES) + prow(R_RB2, LANES)          # [BS, 128]

    # CLS rows (token 0 of each sequence) -> output, 8-aligned sublane slices.
    for b in range(B):
        out_ref[b:b + 1, :] = goals[b * S:b * S + 1, :]


# ------------------------------- wrapper --------------------------------------
def bert_to_goal_value_forward(src, packed, per_goal_attention=False):
    """src = {'input_ids': [B,S] int32, 'attention_mask': [B,S]}.  Returns [B, G]."""
    if per_goal_attention:
        # TODO(synk): per-goal attention branch not implemented.
        raise NotImplementedError("per_goal_attention=True branch not implemented")

    ids = src["input_ids"].reshape(BS, 1).astype(jnp.int32)
    mask = src["attention_mask"].reshape(1, BS).astype(jnp.float32)

    vmem = pl.BlockSpec(memory_space=pltpu.MemorySpace.VMEM)   # whole array in VMEM
    out = pl.pallas_call(
        fused_bert_to_goal_kernel,
        out_shape=jax.ShapeDtypeStruct((B, LANES), jnp.float32),
        in_specs=[vmem, vmem, vmem, vmem],
        out_specs=vmem,
    )(ids, mask, packed["fslab"], packed["wslab"])
    return out[:, :G]                                          # [B, G]


# --------------------------- parameter construction --------------------------
def make_params(key):
    ks = jax.random.split(key, 10)
    std = 0.02
    return {
        "word_emb": jax.random.normal(ks[0], (VOCAB, H), jnp.float32) * std,
        "pos_emb": jax.random.normal(ks[1], (S, H), jnp.float32) * std,
        "ln0_g": jnp.ones((1, H), jnp.float32), "ln0_b": jnp.zeros((1, H), jnp.float32),
        "wq": jax.random.normal(ks[2], (H, H), jnp.float32) * std,
        "bq": jnp.zeros((1, H), jnp.float32),
        "wk": jax.random.normal(ks[3], (H, H), jnp.float32) * std,
        "bk": jnp.zeros((1, H), jnp.float32),
        "wv": jax.random.normal(ks[4], (H, H), jnp.float32) * std,
        "bv": jnp.zeros((1, H), jnp.float32),
        "wo": jax.random.normal(ks[5], (H, H), jnp.float32) * std,
        "bo": jnp.zeros((1, H), jnp.float32),
        "ln1_g": jnp.ones((1, H), jnp.float32), "ln1_b": jnp.zeros((1, H), jnp.float32),
        "w1": jax.random.normal(ks[6], (H, F), jnp.float32) * std,
        "c1": jnp.zeros((1, F), jnp.float32),
        "w2": jax.random.normal(ks[7], (F, H), jnp.float32) * std,
        "c2": jnp.zeros((1, H), jnp.float32),
        "ln2_g": jnp.ones((1, H), jnp.float32), "ln2_b": jnp.zeros((1, H), jnp.float32),
        "rw1": jax.random.normal(ks[8], (H, H), jnp.float32) * std,
        "rb1": jnp.zeros((1, H), jnp.float32),
        "rw2": jax.random.normal(ks[9], (H, G), jnp.float32) * std,
        "rb2": jnp.zeros((1, G), jnp.float32),
    }


def pack_params(p):
    """Pack 22 small tensors into 2 kernel slabs (done once, outside forward)."""
    # ---- bf16 weight slab [W_ROWS, 128] --------------------------------------
    w = jnp.zeros((W_ROWS, LANES), jnp.float32)
    w = w.at[R_WEMB:R_WEMB + VOCAB, :H].set(p["word_emb"])
    w = w.at[R_WQ:R_WQ + H, :H].set(p["wq"])
    w = w.at[R_WK:R_WK + H, :H].set(p["wk"])
    w = w.at[R_WV:R_WV + H, :H].set(p["wv"])
    w = w.at[R_WO:R_WO + H, :H].set(p["wo"])
    w = w.at[R_W1:R_W1 + H, :F].set(p["w1"])
    w = w.at[R_W2:R_W2 + F, :H].set(p["w2"])
    w = w.at[R_RW1:R_RW1 + H, :H].set(p["rw1"])
    w = w.at[R_RW2:R_RW2 + H, :G].set(p["rw2"])      # lane-padded to 128 -> dense out
    wslab = w.astype(jnp.bfloat16)

    # ---- f32 param slab [F_ROWS, 128] ----------------------------------------
    f = jnp.zeros((F_ROWS, LANES), jnp.float32)
    f = f.at[R_POS:R_POS + BS, :H].set(jnp.tile(p["pos_emb"], (B, 1)))
    # block-diagonal cross-batch attention bias (constant, baked in at pack time)
    batch_ix = jnp.arange(BS) // S
    xmask = jnp.where(batch_ix[:, None] == batch_ix[None, :], 0.0, -1e9)
    f = f.at[R_XMASK:R_XMASK + BS, :BS].set(xmask.astype(jnp.float32))
    f = f.at[R_LN0G, :H].set(p["ln0_g"][0])
    f = f.at[R_LN0B, :H].set(p["ln0_b"][0])
    f = f.at[R_BQ, :H].set(p["bq"][0])
    f = f.at[R_BK, :H].set(p["bk"][0])
    f = f.at[R_BV, :H].set(p["bv"][0])
    f = f.at[R_BO, :H].set(p["bo"][0])
    f = f.at[R_LN1G, :H].set(p["ln1_g"][0])
    f = f.at[R_LN1B, :H].set(p["ln1_b"][0])
    f = f.at[R_C1, :F].set(p["c1"][0])
    f = f.at[R_C2, :H].set(p["c2"][0])
    f = f.at[R_LN2G, :H].set(p["ln2_g"][0])
    f = f.at[R_LN2B, :H].set(p["ln2_b"][0])
    f = f.at[R_RB1, :H].set(p["rb1"][0])
    f = f.at[R_RB2, :G].set(p["rb2"][0])
    return {"fslab": f, "wslab": wslab}


# ------------------------------------ main -----------------------------------
if __name__ == "__main__":
    key = jax.random.PRNGKey(0)
    k_param, k_ids = jax.random.split(key)

    params = make_params(k_param)
    packed = pack_params(params)

    src = {
        "input_ids": jax.random.randint(k_ids, (B, S), 0, VOCAB, dtype=jnp.int32),
        "attention_mask": jnp.ones((B, S), jnp.float32),
    }
    selections = None  # unused by forward, kept for signature parity

    goal_values = bert_to_goal_value_forward(src, packed, per_goal_attention=False)
    goal_values = jax.block_until_ready(goal_values)

    assert goal_values.shape == (B, G)
    assert goal_values.dtype == jnp.float32
    assert bool(jnp.all(jnp.isfinite(goal_values)))
    print("KERNEL_OK")
</pallas_src>

<mosaic_0001>
module attributes {stable_mosaic.version = 11 : i64} {
  func.func @fused_bert_to_goal_kernel(%arg0: memref<16x1xi32, #tpu.memory_space<vmem>>, %arg1: memref<1x16xf32, #tpu.memory_space<vmem>>, %arg2: memref<48x128xf32, #tpu.memory_space<vmem>>, %arg3: memref<320x128xbf16, #tpu.memory_space<vmem>>, %arg4: memref<2x128xf32, #tpu.memory_space<vmem>>) attributes {dimension_semantics = [], scalar_prefetch = 0 : i64, scratch_operands = 0 : i64, tpu.core_type = #tpu.core_type<tc>} {
    %c0 = arith.constant 0 : index
    %c0_0 = arith.constant 0 : index
    %0 = vector.load %arg0[%c0, %c0_0] : memref<16x1xi32, #tpu.memory_space<vmem>>, vector<16x1xi32>
    %1 = tpu.iota {dimensions = array<i32: 1>} : vector<16x32xi32>
    %2 = vector.broadcast %0 : vector<16x1xi32> to vector<16x32xi32>
    %3 = arith.cmpi eq, %2, %1 : vector<16x32xi32>
    %4 = arith.extui %3 : vector<16x32xi1> to vector<16x32xi32>
    %5 = arith.sitofp %4 : vector<16x32xi32> to vector<16x32xf32>
    %6 = arith.truncf %5 : vector<16x32xf32> to vector<16x32xbf16>
    %c0_1 = arith.constant 0 : index
    %c0_2 = arith.constant 0 : index
    %7 = vector.load %arg3[%c0_1, %c0_2] : memref<320x128xbf16, #tpu.memory_space<vmem>>, vector<32x32xbf16>
    %cst = arith.constant dense<0.000000e+00> : vector<16x32xf32>
    %8 = tpu.matmul %6, %7, %cst {dimension_numbers = #tpu.dot_dimension_numbers<[1], [0], [0], [1], [0, 0, 1, 1], [], []>} : vector<16x32xbf16>, vector<32x32xbf16>, vector<16x32xf32> -> vector<16x32xf32>
    %c0_3 = arith.constant 0 : index
    %c0_4 = arith.constant 0 : index
    %9 = vector.load %arg2[%c0_3, %c0_4] : memref<48x128xf32, #tpu.memory_space<vmem>>, vector<16x32xf32>
    %10 = arith.addf %8, %9 : vector<16x32xf32>
    %cst_5 = arith.constant dense<0.000000e+00> : vector<16xf32>
    %11 = vector.multi_reduction <add>, %10, %cst_5 [1] : vector<16x32xf32> to vector<16xf32>
    %12 = vector.shape_cast %11 : vector<16xf32> to vector<16x1xf32>
    %cst_6 = arith.constant 3.200000e+01 : f32
    %13 = vector.broadcast %cst_6 : f32 to vector<16x1xf32>
    %14 = arith.divf %12, %13 : vector<16x1xf32>
    %15 = vector.broadcast %14 : vector<16x1xf32> to vector<16x32xf32>
    %16 = arith.subf %10, %15 : vector<16x32xf32>
    %17 = arith.mulf %16, %16 : vector<16x32xf32>
    %cst_7 = arith.constant dense<0.000000e+00> : vector<16xf32>
    %18 = vector.multi_reduction <add>, %17, %cst_7 [1] : vector<16x32xf32> to vector<16xf32>
    %19 = vector.shape_cast %18 : vector<16xf32> to vector<16x1xf32>
    %cst_8 = arith.constant 3.200000e+01 : f32
    %20 = vector.broadcast %cst_8 : f32 to vector<16x1xf32>
    %21 = arith.divf %19, %20 : vector<16x1xf32>
    %22 = vector.broadcast %14 : vector<16x1xf32> to vector<16x32xf32>
    %23 = arith.subf %10, %22 : vector<16x32xf32>
    %cst_9 = arith.constant 9.99999996E-13 : f32
    %24 = vector.broadcast %cst_9 : f32 to vector<16x1xf32>
    %25 = arith.addf %21, %24 : vector<16x1xf32>
    %26 = math.rsqrt %25 : vector<16x1xf32>
    %27 = vector.broadcast %26 : vector<16x1xf32> to vector<16x32xf32>
    %28 = arith.mulf %23, %27 : vector<16x32xf32>
    %c32 = arith.constant 32 : index
    %c0_10 = arith.constant 0 : index
    %29 = vector.load %arg2[%c32, %c0_10] : memref<48x128xf32, #tpu.memory_space<vmem>>, vector<1x32xf32>
    %30 = vector.broadcast %29 : vector<1x32xf32> to vector<16x32xf32>
    %31 = arith.mulf %28, %30 : vector<16x32xf32>
    %c33 = arith.constant 33 : index
    %c0_11 = arith.constant 0 : index
    %32 = vector.load %arg2[%c33, %c0_11] : memref<48x128xf32, #tpu.memory_space<vmem>>, vector<1x32xf32>
    %33 = vector.broadcast %32 : vector<1x32xf32> to vector<16x32xf32>
    %34 = arith.addf %31, %33 : vector<16x32xf32>
    %35 = arith.truncf %34 : vector<16x32xf32> to vector<16x32xbf16>
    %c32_12 = arith.constant 32 : index
    %c0_13 = arith.constant 0 : index
    %36 = vector.load %arg3[%c32_12, %c0_13] : memref<320x128xbf16, #tpu.memory_space<vmem>>, vector<32x32xbf16>
    %cst_14 = arith.constant dense<0.000000e+00> : vector<16x32xf32>
    %37 = tpu.matmul %35, %36, %cst_14 {dimension_numbers = #tpu.dot_dimension_numbers<[1], [0], [0], [1], [0, 0, 1, 1], [], []>} : vector<16x32xbf16>, vector<32x32xbf16>, vector<16x32xf32> -> vector<16x32xf32>
    %c34 = arith.constant 34 : index
    %c0_15 = arith.constant 0 : index
    %38 = vector.load %arg2[%c34, %c0_15] : memref<48x128xf32, #tpu.memory_space<vmem>>, vector<1x32xf32>
    %39 = vector.broadcast %38 : vector<1x32xf32> to vector<16x32xf32>
    %40 = arith.addf %37, %39 : vector<16x32xf32>
    %41 = arith.truncf %34 : vector<16x32xf32> to vector<16x32xbf16>
    %c64 = arith.constant 64 : index
    %c0_16 = arith.constant 0 : index
    %42 = vector.load %arg3[%c64, %c0_16] : memref<320x128xbf16, #tpu.memory_space<vmem>>, vector<32x32xbf16>
    %cst_17 = arith.constant dense<0.000000e+00> : vector<16x32xf32>
    %43 = tpu.matmul %41, %42, %cst_17 {dimension_numbers = #tpu.dot_dimension_numbers<[1], [0], [0], [1], [0, 0, 1, 1], [], []>} : vector<16x32xbf16>, vector<32x32xbf16>, vector<16x32xf32> -> vector<16x32xf32>
    %c35 = arith.constant 35 : index
    %c0_18 = arith.constant 0 : index
    %44 = vector.load %arg2[%c35, %c0_18] : memref<48x128xf32, #tpu.memory_space<vmem>>, vector<1x32xf32>
    %45 = vector.broadcast %44 : vector<1x32xf32> to vector<16x32xf32>
    %46 = arith.addf %43, %45 : vector<16x32xf32>
    %47 = arith.truncf %34 : vector<16x32xf32> to vector<16x32xbf16>
    %c96 = arith.constant 96 : index
    %c0_19 = arith.constant 0 : index
    %48 = vector.load %arg3[%c96, %c0_19] : memref<320x128xbf16, #tpu.memory_space<vmem>>, vector<32x32xbf16>
    %cst_20 = arith.constant dense<0.000000e+00> : vector<16x32xf32>
    %49 = tpu.matmul %47, %48, %cst_20 {dimension_numbers = #tpu.dot_dimension_numbers<[1], [0], [0], [1], [0, 0, 1, 1], [], []>} : vector<16x32xbf16>, vector<32x32xbf16>, vector<16x32xf32> -> vector<16x32xf32>
    %c36 = arith.constant 36 : index
    %c0_21 = arith.constant 0 : index
    %50 = vector.load %arg2[%c36, %c0_21] : memref<48x128xf32, #tpu.memory_space<vmem>>, vector<1x32xf32>
    %51 = vector.broadcast %50 : vector<1x32xf32> to vector<16x32xf32>
    %52 = arith.addf %49, %51 : vector<16x32xf32>
    %c0_22 = arith.constant 0 : index
    %c0_23 = arith.constant 0 : index
    %53 = vector.load %arg1[%c0_22, %c0_23] : memref<1x16xf32, #tpu.memory_space<vmem>>, vector<1x16xf32>
    %c16 = arith.constant 16 : index
    %c0_24 = arith.constant 0 : index
    %54 = vector.load %arg2[%c16, %c0_24] : memref<48x128xf32, #tpu.memory_space<vmem>>, vector<16x16xf32>
    %cst_25 = arith.constant 1.000000e+00 : f32
    %55 = vector.broadcast %cst_25 : f32 to vector<1x16xf32>
    %56 = arith.subf %53, %55 : vector<1x16xf32>
    %cst_26 = arith.constant 1.000000e+09 : f32
    %57 = vector.broadcast %cst_26 : f32 to vector<1x16xf32>
    %58 = arith.mulf %56, %57 : vector<1x16xf32>
    %59 = vector.broadcast %58 : vector<1x16xf32> to vector<16x16xf32>
    %60 = arith.addf %54, %59 : vector<16x16xf32>
    %61 = arith.truncf %40 : vector<16x32xf32> to vector<16x32xbf16>
    %62 = arith.truncf %46 : vector<16x32xf32> to vector<16x32xbf16>
    %cst_27 = arith.constant dense<0.000000e+00> : vector<16x16xf32>
    %63 = tpu.matmul %61, %62, %cst_27 {dimension_numbers = #tpu.dot_dimension_numbers<[1], [1], [0], [0], [0, 0, 1, 0], [], []>} : vector<16x32xbf16>, vector<16x32xbf16>, vector<16x16xf32> -> vector<16x16xf32>
    %cst_28 = arith.constant 0.176776692 : f32
    %64 = vector.broadcast %cst_28 : f32 to vector<16x16xf32>
    %65 = arith.mulf %63, %64 : vector<16x16xf32>
    %66 = arith.addf %65, %60 : vector<16x16xf32>
    %cst_29 = arith.constant dense<0xFF800000> : vector<16xf32>
    %67 = vector.multi_reduction <maximumf>, %66, %cst_29 [1] : vector<16x16xf32> to vector<16xf32>
    %68 = vector.shape_cast %67 : vector<16xf32> to vector<16x1xf32>
    %69 = vector.broadcast %68 : vector<16x1xf32> to vector<16x16xf32>
    %70 = arith.subf %66, %69 : vector<16x16xf32>
    %71 = math.exp %70 : vector<16x16xf32>
    %cst_30 = arith.constant dense<0.000000e+00> : vector<16xf32>
    %72 = vector.multi_reduction <add>, %71, %cst_30 [1] : vector<16x16xf32> to vector<16xf32>
    %73 = vector.shape_cast %72 : vector<16xf32> to vector<16x1xf32>
    %74 = tpu.reciprocal %73 {approx = true} : vector<16x1xf32> -> vector<16x1xf32>
    %75 = vector.broadcast %74 : vector<16x1xf32> to vector<16x16xf32>
    %76 = arith.mulf %71, %75 : vector<16x16xf32>
    %77 = arith.truncf %76 : vector<16x16xf32> to vector<16x16xbf16>
    %78 = arith.truncf %52 : vector<16x32xf32> to vector<16x32xbf16>
    %cst_31 = arith.constant dense<0.000000e+00> : vector<16x32xf32>
    %79 = tpu.matmul %77, %78, %cst_31 {dimension_numbers = #tpu.dot_dimension_numbers<[1], [0], [0], [1], [0, 0, 1, 1], [], []>} : vector<16x16xbf16>, vector<16x32xbf16>, vector<16x32xf32> -> vector<16x32xf32>
    %80 = arith.truncf %79 : vector<16x32xf32> to vector<16x32xbf16>
    %c128 = arith.constant 128 : index
    %c0_32 = arith.constant 0 : index
    %81 = vector.load %arg3[%c128, %c0_32] : memref<320x128xbf16, #tpu.memory_space<vmem>>, vector<32x32xbf16>
    %cst_33 = arith.constant dense<0.000000e+00> : vector<16x32xf32>
    %82 = tpu.matmul %80, %81, %cst_33 {dimension_numbers = #tpu.dot_dimension_numbers<[1], [0], [0], [1], [0, 0, 1, 1], [], []>} : vector<16x32xbf16>, vector<32x32xbf16>, vector<16x32xf32> -> vector<16x32xf32>
    %c37 = arith.constant 37 : index
    %c0_34 = arith.constant 0 : index
    %83 = vector.load %arg2[%c37, %c0_34] : memref<48x128xf32, #tpu.memory_space<vmem>>, vector<1x32xf32>
    %84 = vector.broadcast %83 : vector<1x32xf32> to vector<16x32xf32>
    %85 = arith.addf %82, %84 : vector<16x32xf32>
    %86 = arith.addf %34, %85 : vector<16x32xf32>
    %cst_35 = arith.constant dense<0.000000e+00> : vector<16xf32>
    %87 = vector.multi_reduction <add>, %86, %cst_35 [1] : vector<16x32xf32> to vector<16xf32>
    %88 = vector.shape_cast %87 : vector<16xf32> to vector<16x1xf32>
    %cst_36 = arith.constant 3.200000e+01 : f32
    %89 = vector.broadcast %cst_36 : f32 to vector<16x1xf32>
    %90 = arith.divf %88, %89 : vector<16x1xf32>
    %91 = vector.broadcast %90 : vector<16x1xf32> to vector<16x32xf32>
    %92 = arith.subf %86, %91 : vector<16x32xf32>
    %93 = arith.mulf %92, %92 : vector<16x32xf32>
    %cst_37 = arith.constant dense<0.000000e+00> : vector<16xf32>
    %94 = vector.multi_reduction <add>, %93, %cst_37 [1] : vector<16x32xf32> to vector<16xf32>
    %95 = vector.shape_cast %94 : vector<16xf32> to vector<16x1xf32>
    %cst_38 = arith.constant 3.200000e+01 : f32
    %96 = vector.broadcast %cst_38 : f32 to vector<16x1xf32>
    %97 = arith.divf %95, %96 : vector<16x1xf32>
    %98 = vector.broadcast %90 : vector<16x1xf32> to vector<16x32xf32>
    %99 = arith.subf %86, %98 : vector<16x32xf32>
    %cst_39 = arith.constant 9.99999996E-13 : f32
    %100 = vector.broadcast %cst_39 : f32 to vector<16x1xf32>
    %101 = arith.addf %97, %100 : vector<16x1xf32>
    %102 = math.rsqrt %101 : vector<16x1xf32>
    %103 = vector.broadcast %102 : vector<16x1xf32> to vector<16x32xf32>
    %104 = arith.mulf %99, %103 : vector<16x32xf32>
    %c38 = arith.constant 38 : index
    %c0_40 = arith.constant 0 : index
    %105 = vector.load %arg2[%c38, %c0_40] : memref<48x128xf32, #tpu.memory_space<vmem>>, vector<1x32xf32>
    %106 = vector.broadcast %105 : vector<1x32xf32> to vector<16x32xf32>
    %107 = arith.mulf %104, %106 : vector<16x32xf32>
    %c39 = arith.constant 39 : index
    %c0_41 = arith.constant 0 : index
    %108 = vector.load %arg2[%c39, %c0_41] : memref<48x128xf32, #tpu.memory_space<vmem>>, vector<1x32xf32>
    %109 = vector.broadcast %108 : vector<1x32xf32> to vector<16x32xf32>
    %110 = arith.addf %107, %109 : vector<16x32xf32>
    %111 = arith.truncf %110 : vector<16x32xf32> to vector<16x32xbf16>
    %c160 = arith.constant 160 : index
    %c0_42 = arith.constant 0 : index
    %112 = vector.load %arg3[%c160, %c0_42] : memref<320x128xbf16, #tpu.memory_space<vmem>>, vector<32x64xbf16>
    %cst_43 = arith.constant dense<0.000000e+00> : vector<16x64xf32>
    %113 = tpu.matmul %111, %112, %cst_43 {dimension_numbers = #tpu.dot_dimension_numbers<[1], [0], [0], [1], [0, 0, 1, 1], [], []>} : vector<16x32xbf16>, vector<32x64xbf16>, vector<16x64xf32> -> vector<16x64xf32>
    %c40 = arith.constant 40 : index
    %c0_44 = arith.constant 0 : index
    %114 = vector.load %arg2[%c40, %c0_44] : memref<48x128xf32, #tpu.memory_space<vmem>>, vector<1x64xf32>
    %115 = vector.broadcast %114 : vector<1x64xf32> to vector<16x64xf32>
    %116 = arith.addf %113, %115 : vector<16x64xf32>
    %117 = arith.mulf %116, %116 : vector<16x64xf32>
    %118 = arith.mulf %116, %117 : vector<16x64xf32>
    %cst_45 = arith.constant 4.471500e-02 : f32
    %119 = vector.broadcast %cst_45 : f32 to vector<16x64xf32>
    %120 = arith.mulf %119, %118 : vector<16x64xf32>
    %121 = arith.addf %116, %120 : vector<16x64xf32>
    %cst_46 = arith.constant 0.797884583 : f32
    %122 = vector.broadcast %cst_46 : f32 to vector<16x64xf32>
    %123 = arith.mulf %122, %121 : vector<16x64xf32>
    %124 = math.tanh %123 : vector<16x64xf32>
    %cst_47 = arith.constant 1.000000e+00 : f32
    %125 = vector.broadcast %cst_47 : f32 to vector<16x64xf32>
    %126 = arith.addf %125, %124 : vector<16x64xf32>
    %cst_48 = arith.constant 5.000000e-01 : f32
    %127 = vector.broadcast %cst_48 : f32 to vector<16x64xf32>
    %128 = arith.mulf %127, %126 : vector<16x64xf32>
    %129 = arith.mulf %116, %128 : vector<16x64xf32>
    %130 = arith.truncf %129 : vector<16x64xf32> to vector<16x64xbf16>
    %c192 = arith.constant 192 : index
    %c0_49 = arith.constant 0 : index
    %131 = vector.load %arg3[%c192, %c0_49] : memref<320x128xbf16, #tpu.memory_space<vmem>>, vector<64x32xbf16>
    %cst_50 = arith.constant dense<0.000000e+00> : vector<16x32xf32>
    %132 = tpu.matmul %130, %131, %cst_50 {dimension_numbers = #tpu.dot_dimension_numbers<[1], [0], [0], [1], [0, 0, 1, 1], [], []>} : vector<16x64xbf16>, vector<64x32xbf16>, vector<16x32xf32> -> vector<16x32xf32>
    %c41 = arith.constant 41 : index
    %c0_51 = arith.constant 0 : index
    %133 = vector.load %arg2[%c41, %c0_51] : memref<48x128xf32, #tpu.memory_space<vmem>>, vector<1x32xf32>
    %134 = vector.broadcast %133 : vector<1x32xf32> to vector<16x32xf32>
    %135 = arith.addf %132, %134 : vector<16x32xf32>
    %136 = arith.addf %110, %135 : vector<16x32xf32>
    %cst_52 = arith.constant dense<0.000000e+00> : vector<16xf32>
    %137 = vector.multi_reduction <add>, %136, %cst_52 [1] : vector<16x32xf32> to vector<16xf32>
    %138 = vector.shape_cast %137 : vector<16xf32> to vector<16x1xf32>
    %cst_53 = arith.constant 3.200000e+01 : f32
    %139 = vector.broadcast %cst_53 : f32 to vector<16x1xf32>
    %140 = arith.divf %138, %139 : vector<16x1xf32>
    %141 = vector.broadcast %140 : vector<16x1xf32> to vector<16x32xf32>
    %142 = arith.subf %136, %141 : vector<16x32xf32>
    %143 = arith.mulf %142, %142 : vector<16x32xf32>
    %cst_54 = arith.constant dense<0.000000e+00> : vector<16xf32>
    %144 = vector.multi_reduction <add>, %143, %cst_54 [1] : vector<16x32xf32> to vector<16xf32>
    %145 = vector.shape_cast %144 : vector<16xf32> to vector<16x1xf32>
    %cst_55 = arith.constant 3.200000e+01 : f32
    %146 = vector.broadcast %cst_55 : f32 to vector<16x1xf32>
    %147 = arith.divf %145, %146 : vector<16x1xf32>
    %148 = vector.broadcast %140 : vector<16x1xf32> to vector<16x32xf32>
    %149 = arith.subf %136, %148 : vector<16x32xf32>
    %cst_56 = arith.constant 9.99999996E-13 : f32
    %150 = vector.broadcast %cst_56 : f32 to vector<16x1xf32>
    %151 = arith.addf %147, %150 : vector<16x1xf32>
    %152 = math.rsqrt %151 : vector<16x1xf32>
    %153 = vector.broadcast %152 : vector<16x1xf32> to vector<16x32xf32>
    %154 = arith.mulf %149, %153 : vector<16x32xf32>
    %c42 = arith.constant 42 : index
    %c0_57 = arith.constant 0 : index
    %155 = vector.load %arg2[%c42, %c0_57] : memref<48x128xf32, #tpu.memory_space<vmem>>, vector<1x32xf32>
    %156 = vector.broadcast %155 : vector<1x32xf32> to vector<16x32xf32>
    %157 = arith.mulf %154, %156 : vector<16x32xf32>
    %c43 = arith.constant 43 : index
    %c0_58 = arith.constant 0 : index
    %158 = vector.load %arg2[%c43, %c0_58] : memref<48x128xf32, #tpu.memory_space<vmem>>, vector<1x32xf32>
    %159 = vector.broadcast %158 : vector<1x32xf32> to vector<16x32xf32>
    %160 = arith.addf %157, %159 : vector<16x32xf32>
    %161 = arith.truncf %160 : vector<16x32xf32> to vector<16x32xbf16>
    %c256 = arith.constant 256 : index
    %c0_59 = arith.constant 0 : index
    %162 = vector.load %arg3[%c256, %c0_59] : memref<320x128xbf16, #tpu.memory_space<vmem>>, vector<32x32xbf16>
    %cst_60 = arith.constant dense<0.000000e+00> : vector<16x32xf32>
    %163 = tpu.matmul %161, %162, %cst_60 {dimension_numbers = #tpu.dot_dimension_numbers<[1], [0], [0], [1], [0, 0, 1, 1], [], []>} : vector<16x32xbf16>, vector<32x32xbf16>, vector<16x32xf32> -> vector<16x32xf32>
    %c44 = arith.constant 44 : index
    %c0_61 = arith.constant 0 : index
    %164 = vector.load %arg2[%c44, %c0_61] : memref<48x128xf32, #tpu.memory_space<vmem>>, vector<1x32xf32>
    %165 = vector.broadcast %164 : vector<1x32xf32> to vector<16x32xf32>
    %166 = arith.addf %163, %165 : vector<16x32xf32>
    %167 = arith.mulf %166, %166 : vector<16x32xf32>
    %168 = arith.mulf %166, %167 : vector<16x32xf32>
    %cst_62 = arith.constant 4.471500e-02 : f32
    %169 = vector.broadcast %cst_62 : f32 to vector<16x32xf32>
    %170 = arith.mulf %169, %168 : vector<16x32xf32>
    %171 = arith.addf %166, %170 : vector<16x32xf32>
    %cst_63 = arith.constant 0.797884583 : f32
    %172 = vector.broadcast %cst_63 : f32 to vector<16x32xf32>
    %173 = arith.mulf %172, %171 : vector<16x32xf32>
    %174 = math.tanh %173 : vector<16x32xf32>
    %cst_64 = arith.constant 1.000000e+00 : f32
    %175 = vector.broadcast %cst_64 : f32 to vector<16x32xf32>
    %176 = arith.addf %175, %174 : vector<16x32xf32>
    %cst_65 = arith.constant 5.000000e-01 : f32
    %177 = vector.broadcast %cst_65 : f32 to vector<16x32xf32>
    %178 = arith.mulf %177, %176 : vector<16x32xf32>
    %179 = arith.mulf %166, %178 : vector<16x32xf32>
    %180 = arith.truncf %179 : vector<16x32xf32> to vector<16x32xbf16>
    %c288 = arith.constant 288 : index
    %c0_66 = arith.constant 0 : index
    %181 = vector.load %arg3[%c288, %c0_66] : memref<320x128xbf16, #tpu.memory_space<vmem>>, vector<32x128xbf16>
    %cst_67 = arith.constant dense<0.000000e+00> : vector<16x128xf32>
    %182 = tpu.matmul %180, %181, %cst_67 {dimension_numbers = #tpu.dot_dimension_numbers<[1], [0], [0], [1], [0, 0, 1, 1], [], []>} : vector<16x32xbf16>, vector<32x128xbf16>, vector<16x128xf32> -> vector<16x128xf32>
    %c45 = arith.constant 45 : index
    %c0_68 = arith.constant 0 : index
    %183 = vector.load %arg2[%c45, %c0_68] : memref<48x128xf32, #tpu.memory_space<vmem>>, vector<1x128xf32>
    %184 = vector.broadcast %183 : vector<1x128xf32> to vector<16x128xf32>
    %185 = arith.addf %182, %184 : vector<16x128xf32>
    %186 = vector.extract_strided_slice %185 {offsets = [0, 0], sizes = [1, 128], strides = [1, 1]} : vector<16x128xf32> to vector<1x128xf32>
    %c0_69 = arith.constant 0 : index
    %c0_70 = arith.constant 0 : index
    %187 = vector.load %arg4[%c0_69, %c0_70] : memref<2x128xf32, #tpu.memory_space<vmem>>, vector<1x128xf32>
    tpu.vector_store %arg4[%c0_69, %c0_70], %186 {strides = array<i32>} : memref<2x128xf32, #tpu.memory_space<vmem>>, vector<1x128xf32>,
    %188 = vector.extract_strided_slice %185 {offsets = [8, 0], sizes = [1, 128], strides = [1, 1]} : vector<16x128xf32> to vector<1x128xf32>
    %c1 = arith.constant 1 : index
    %c0_71 = arith.constant 0 : index
    %189 = vector.load %arg4[%c1, %c0_71] : memref<2x128xf32, #tpu.memory_space<vmem>>, vector<1x128xf32>
    tpu.vector_store %arg4[%c1, %c0_71], %188 {strides = array<i32>} : memref<2x128xf32, #tpu.memory_space<vmem>>, vector<1x128xf32>,
    return
  }
}

</mosaic_0001>

<llo_original>
// kernel: tpu_custom_call.1
$region0: #{tpu_custom_call.1}
  #allocation0 [shape = 'u32[]', space=smem, size = 0x4, offset = 0x4, fixed_abs, tag = 'smem constant byte address 0x4 - core index']
  #allocation1 [shape = 'u32[144,128]{1,0:T(1,128)}', space=vmem, size = 0x12000, scoped, tag = 'internal scratch']
  %s0 = inlined_call_operand.vmem [shape: s32[16,1], index: 0, kind: input, shape index: {}]
  %s1 = inlined_call_operand.vmem [shape: f32[1,16], index: 1, kind: input, shape index: {}]
  %s2 = inlined_call_operand.hbm [shape: f32[48,128], index: 2, kind: input, shape index: {}]
  %s3 = inlined_call_operand.hbm [shape: bf16[320,128], index: 3, kind: input, shape index: {}]
  %s4 = inlined_call_operand.hbm [shape: f32[2,128], index: 4, kind: output, shape index: {}]
  %s5 = sld [smem:[#allocation0]]
  $region34: #{tpu_custom_call.1} parent=0
    _
  %s7 = ssub.s32 1, %s5
  %s8 = scalar_select 0, %s7, %s5
  $region1: #{tpu_custom_call.1} parent=0
    #allocation2 [shape = 'u8[24576]{0}', space=vmem, size = 0x6000, scoped, tag = 'input window, operand 2, single buffered']
    #allocation3 [shape = 's32[1]{0}', space=sflag, size = 0x4, scoped, tag = 'scoped memory for tpu_custom_call.1']
    #allocation4 [shape = 's32[1]{0}', space=sflag, size = 0x4, scoped, tag = 'scoped memory for tpu_custom_call.1']
    #allocation5 [shape = 'u8[81920]{0}', space=vmem, size = 0x14000, scoped, tag = 'input window, operand 3, single buffered']
    #allocation6 [shape = 's32[1]{0}', space=sflag, size = 0x4, scoped, tag = 'scoped memory for tpu_custom_call.1']
    #allocation7 [shape = 'u8[1024]{0}', space=vmem, size = 0x400, scoped, tag = 'output window, operand 0, single buffered']
    %9 = vsyncpa [#allocation3], 0
    %10 = vsyncpa [#allocation6], 0
    %11 = vsyncpa [#allocation4], 0
    // Predicated region
    $region2: #{tpu_custom_call.1} parent=1 // pred_check
      _
    $region3: #{tpu_custom_call.1} parent=1 // pred_check_branch
      %13 = sbr.rel (0) target = $region5
    $region4: #{tpu_custom_call.1} parent=1 // pred_region
      _
    $region5: #{tpu_custom_call.1} parent=1 // pred_fallthru
      _
    // Predicated region
    $region6: #{tpu_custom_call.1} parent=1 // pred_check
      _
    $region7: #{tpu_custom_call.1} parent=1 // pred_check_branch
      %15 = sbr.rel (0) target = $region9
    $region8: #{tpu_custom_call.1} parent=1 // pred_region
      _
    $region9: #{tpu_custom_call.1} parent=1 // pred_fallthru
      _
    // Predicated region
    $region10: #{tpu_custom_call.1} parent=1 // pred_check
      _
    $region11: #{tpu_custom_call.1} parent=1 // pred_check_branch
      %17 = sbr.rel (0) target = $region13
    $region12: #{tpu_custom_call.1} parent=1 // pred_region
      %s19 = ssub.s32 768, 768
      %20 = vsyncadd [#allocation3], %s19
      %s21 = sshll.u32 [#allocation2], 4
      %s22 = int_to_ptr.vmem [resolvable:$true] %s21
      %27 = dma.hbm_to_vmem [thread:$0]  %s2, 768, %s22, [#allocation3], 128, 128, 8
    $region13: #{tpu_custom_call.1} parent=1 // pred_fallthru
      _
    // Predicated region
    $region14: #{tpu_custom_call.1} parent=1 // pred_check
      _
    $region15: #{tpu_custom_call.1} parent=1 // pred_check_branch
      %29 = sbr.rel (0) target = $region17
    $region16: #{tpu_custom_call.1} parent=1 // pred_region
      %s31 = ssub.s32 2560, 2560
      %32 = vsyncadd [#allocation6], %s31
      %s33 = sshll.u32 [#allocation5], 4
      %s34 = int_to_ptr.vmem [resolvable:$true] %s33
      %39 = dma.hbm_to_vmem [thread:$0]  %s3, 2560, %s34, [#allocation6], 64, 64, 4
    $region17: #{tpu_custom_call.1} parent=1 // pred_fallthru
      _
    // Predicated region
    $region18: #{tpu_custom_call.1} parent=1 // pred_check
      _
    $region19: #{tpu_custom_call.1} parent=1 // pred_check_branch
      %41 = sbr.rel (0) target = $region21
    $region20: #{tpu_custom_call.1} parent=1 // pred_region
      %42 = dma.done [#allocation3], 768
    $region21: #{tpu_custom_call.1} parent=1 // pred_fallthru
      _
    // Predicated region
    $region22: #{tpu_custom_call.1} parent=1 // pred_check
      _
    $region23: #{tpu_custom_call.1} parent=1 // pred_check_branch
      %44 = sbr.rel (0) target = $region25
    $region24: #{tpu_custom_call.1} parent=1 // pred_region
      %45 = dma.done [#allocation6], 2560
    $region25: #{tpu_custom_call.1} parent=1 // pred_fallthru
      _
    %v47 = vld [vmem:[%s0] sm:$0xff]
    %v48 = vld [vmem:[%s0 + $0x8] sm:$0xff]
    %v49 = vlaneseq
    %v50 = vand.u32 %v49, 127
    %51 = vset.pattern.permute.xlu0 0
    %52 = vperm.xlu0 %51, %v47
    %v53 = vpop.permute.xlu0 %52
    %54 = vset.pattern.permute.xlu0 0
    %55 = vperm.xlu0 %54, %v48
    %v56 = vpop.permute.xlu0 %55
    %vm57 = vcmp.eq.s32.totalorder %v53, %v50
    %vm58 = vcmp.eq.s32.totalorder %v56, %v50
    %v59 = vsel %vm57, 1, 0
    %v60 = vsel %vm58, 1, 0
    %v61 = vcvt.s32.f32 %v59
    %v62 = vcvt.s32.f32 %v60
    %v63 = vpack.c.bf16 %v62, %v61
    %v64 = vld [vmem:[#allocation5] sm:$0xf]
    %v65 = vld [vmem:[#allocation5 + $0x4] sm:$0xf]
    %v66 = vld [vmem:[#allocation5 + $0x8] sm:$0xf]
    %v67 = vld [vmem:[#allocation5 + $0xc] sm:$0xf]
    %v68 = vld [vmem:[#allocation2] sm:$0xff]
    %v69 = vld [vmem:[#allocation2 + $0x8] sm:$0xff]
    %v74 = vunpack.c.l.b16 %v64
    %v75 = vunpack.c.l.b16 %v65
    %v76 = vunpack.c.l.b16 %v66
    %v77 = vunpack.c.l.b16 %v67
    %v78 = vpack.c.b16 %v75, %v74
    %v79 = vpack.c.b16 %v77, %v76
    %vm82 = vcmask 261120
    %v84 = vsel %vm82, %v63, 0
    %86 = vmatprep.subr.bf16.mxu0 0
    %87 = vmatpush1.bf16.msra.mxu0 %v78
    %88 = vmatprep.subr.bf16.mxu0 0
    %89 = vmatpush1.bf16.msra.mxu0 %v79
    %90 = vmatprep.subr.bf16.mxu0 0
    %91 = vmatpush1.bf16.msra.mxu0 0
    %92 = vmatprep.subr.bf16.mxu0 0
    %93 = vmatpush1.bf16.msra.mxu0 0
    %94 = vmatprep.subr.bf16.mxu0 0
    %95 = vmatpush1.bf16.msra.mxu0 0
    %96 = vmatprep.subr.bf16.mxu0 0
    %97 = vmatpush1.bf16.msra.mxu0 0
    %98 = vmatprep.subr.bf16.mxu0 0
    %99 = vmatpush1.bf16.msra.mxu0 0
    %100 = vmatprep.subr.bf16.mxu0 0
    %101 = vmatpush1.bf16.msra.mxu0 0
    %102 = vmatprep.subr.bf16.mxu0 0
    %103 = vmatpush1.bf16.msra.mxu0 0
    %104 = vmatprep.subr.bf16.mxu0 0
    %105 = vmatpush1.bf16.msra.mxu0 0
    %106 = vmatprep.subr.bf16.mxu0 0
    %107 = vmatpush1.bf16.msra.mxu0 0
    %108 = vmatprep.subr.bf16.mxu0 0
    %109 = vmatpush1.bf16.msra.mxu0 0
    %110 = vmatprep.subr.bf16.mxu0 0
    %111 = vmatpush1.bf16.msra.mxu0 0
    %112 = vmatprep.subr.bf16.mxu0 0
    %113 = vmatpush1.bf16.msra.mxu0 0
    %114 = vmatprep.subr.bf16.mxu0 0
    %115 = vmatpush1.bf16.msra.mxu0 0
    %116 = vmatprep.subr.bf16.mxu0 0
    %117 = vmatpush1.bf16.msra.mxu0 0
    %118 = vmatprep.mubr.bf16.mxu0 0
    %119 = vmatmul.mubr.bf16.gmra.mrb[0].mxu0 %v84
    %v120 = vpop.f32.mrb[0].mxu0
    %v121 = vadd.f32 %v68, %v120
    %v122 = vpop.f32.mrb[0].mxu0
    %v123 = vpop.f32.mrb[0].mxu0
    %v124 = vadd.f32 %v69, %v123
    %v125 = vpop.f32.mrb[0].mxu0
    %126 = vdwg.mxu0
    %v127 = vsel %vm82, %v121, 0.0
    %128 = vadd.xlane.f32.xlu0 %v127
    %v129 = vpop.xlane.xlu0 %128
    %v130 = vsel %vm82, %v124, 0.0
    %131 = vadd.xlane.f32.xlu0 %v130
    %v132 = vpop.xlane.xlu0 %131
    %v133 = vrcp.pop 32.0
    %v134 = vmul.f32 %v129, %v133
    %v135 = vmul.f32 %v132, %v133
    %v136 = vsub.f32 %v121, %v134
    %v137 = vsub.f32 %v124, %v135
    %v138 = vmul.f32 %v136, %v136
    %v139 = vmul.f32 %v137, %v137
    %v140 = vsel %vm82, %v138, 0.0
    %141 = vadd.xlane.f32.xlu0 %v140
    %v142 = vpop.xlane.xlu0 %141
    %v143 = vsel %vm82, %v139, 0.0
    %144 = vadd.xlane.f32.xlu0 %v143
    %v145 = vpop.xlane.xlu0 %144
    %v146 = vmul.f32 %v142, %v133
    %v147 = vmul.f32 %v145, %v133
    %v148 = vadd.f32 %v146, 1e-12
    %v149 = vadd.f32 %v147, 1e-12
    %v150 = vrsqrt.pop %v148
    %v151 = vrsqrt.pop %v149
    %v152 = vmul.f32 %v136, %v150
    %v153 = vmul.f32 %v137, %v151
    %v154 = vld [vmem:[#allocation2 + $0x20] sm:$0x1]
    %v155 = vlaneseq
    %v156 = vshrl.u32 %v155, 7
    %v157 = vsub.s32 0, %v156
    %v158 = vrot.slane %v154, %v157
    %v159 = vmul.f32 %v152, %v158
    %v160 = vmul.f32 %v153, %v158
    %v161 = vld [vmem:[#allocation2 + $0x21] sm:$0x1]
    %v162 = vlaneseq
    %v163 = vshrl.u32 %v162, 7
    %v164 = vsub.s32 0, %v163
    %v165 = vrot.slane %v161, %v164
    %v166 = vadd.f32 %v159, %v165
    %v167 = vadd.f32 %v160, %v165
    %v168 = vpack.c.bf16 %v167, %v166
    %v169 = vld [vmem:[#allocation5 + $0x10] sm:$0xf]
    %v170 = vld [vmem:[#allocation5 + $0x14] sm:$0xf]
    %v171 = vld [vmem:[#allocation5 + $0x18] sm:$0xf]
    %v172 = vld [vmem:[#allocation5 + $0x1c] sm:$0xf]
    %v173 = vld [vmem:[#allocation2 + $0x22] sm:$0x1]
    %v174 = vlaneseq
    %v175 = vshrl.u32 %v174, 7
    %v176 = vsub.s32 0, %v175
    %v177 = vrot.slane %v173, %v176
    %v182 = vunpack.c.l.b16 %v169
    %v183 = vunpack.c.l.b16 %v170
    %v184 = vunpack.c.l.b16 %v171
    %v185 = vunpack.c.l.b16 %v172
    %v186 = vpack.c.b16 %v183, %v182
    %v187 = vpack.c.b16 %v185, %v184
    %v191 = vsel %vm82, %v168, 0
    %193 = vmatprep.subr.bf16.mxu0 0
    %194 = vmatpush1.bf16.msra.mxu0 %v186
    %195 = vmatprep.subr.bf16.mxu0 0
    %196 = vmatpush1.bf16.msra.mxu0 %v187
    %197 = vmatprep.subr.bf16.mxu0 0
    %198 = vmatpush1.bf16.msra.mxu0 0
    %199 = vmatprep.subr.bf16.mxu0 0
    %200 = vmatpush1.bf16.msra.mxu0 0
    %201 = vmatprep.subr.bf16.mxu0 0
    %202 = vmatpush1.bf16.msra.mxu0 0
    %203 = vmatprep.subr.bf16.mxu0 0
    %204 = vmatpush1.bf16.msra.mxu0 0
    %205 = vmatprep.subr.bf16.mxu0 0
    %206 = vmatpush1.bf16.msra.mxu0 0
    %207 = vmatprep.subr.bf16.mxu0 0
    %208 = vmatpush1.bf16.msra.mxu0 0
    %209 = vmatprep.subr.bf16.mxu0 0
    %210 = vmatpush1.bf16.msra.mxu0 0
    %211 = vmatprep.subr.bf16.mxu0 0
    %212 = vmatpush1.bf16.msra.mxu0 0
    %213 = vmatprep.subr.bf16.mxu0 0
    %214 = vmatpush1.bf16.msra.mxu0 0
    %215 = vmatprep.subr.bf16.mxu0 0
    %216 = vmatpush1.bf16.msra.mxu0 0
    %217 = vmatprep.subr.bf16.mxu0 0
    %218 = vmatpush1.bf16.msra.mxu0 0
    %219 = vmatprep.subr.bf16.mxu0 0
    %220 = vmatpush1.bf16.msra.mxu0 0
    %221 = vmatprep.subr.bf16.mxu0 0
    %222 = vmatpush1.bf16.msra.mxu0 0
    %223 = vmatprep.subr.bf16.mxu0 0
    %224 = vmatpush1.bf16.msra.mxu0 0
    %225 = vmatprep.mubr.bf16.mxu0 0
    %226 = vmatmul.mubr.bf16.gmra.mrb[0].mxu0 %v191
    %v227 = vpop.f32.mrb[0].mxu0
    %v228 = vadd.f32 %v177, %v227
    %v229 = vpop.f32.mrb[0].mxu0
    %v230 = vpop.f32.mrb[0].mxu0
    %v231 = vadd.f32 %v177, %v230
    %v232 = vpop.f32.mrb[0].mxu0
    %233 = vdwg.mxu0
    %v234 = vld [vmem:[#allocation5 + $0x20] sm:$0xf]
    %v235 = vld [vmem:[#allocation5 + $0x24] sm:$0xf]
    %v236 = vld [vmem:[#allocation5 + $0x28] sm:$0xf]
    %v237 = vld [vmem:[#allocation5 + $0x2c] sm:$0xf]
    %v238 = vld [vmem:[#allocation2 + $0x23] sm:$0x1]
    %v239 = vlaneseq
    %v240 = vshrl.u32 %v239, 7
    %v241 = vsub.s32 0, %v240
    %v242 = vrot.slane %v238, %v241
    %v247 = vunpack.c.l.b16 %v234
    %v248 = vunpack.c.l.b16 %v235
    %v249 = vunpack.c.l.b16 %v236
    %v250 = vunpack.c.l.b16 %v237
    %v251 = vpack.c.b16 %v248, %v247
    %v252 = vpack.c.b16 %v250, %v249
    %255 = vmatprep.subr.bf16.mxu0 0
    %256 = vmatpush1.bf16.msra.mxu0 %v251
    %257 = vmatprep.subr.bf16.mxu0 0
    %258 = vmatpush1.bf16.msra.mxu0 %v252
    %259 = vmatprep.subr.bf16.mxu0 0
    %260 = vmatpush1.bf16.msra.mxu0 0
    %261 = vmatprep.subr.bf16.mxu0 0
    %262 = vmatpush1.bf16.msra.mxu0 0
    %263 = vmatprep.subr.bf16.mxu0 0
    %264 = vmatpush1.bf16.msra.mxu0 0
    %265 = vmatprep.subr.bf16.mxu0 0
    %266 = vmatpush1.bf16.msra.mxu0 0
    %267 = vmatprep.subr.bf16.mxu0 0
    %268 = vmatpush1.bf16.msra.mxu0 0
    %269 = vmatprep.subr.bf16.mxu0 0
    %270 = vmatpush1.bf16.msra.mxu0 0
    %271 = vmatprep.subr.bf16.mxu0 0
    %272 = vmatpush1.bf16.msra.mxu0 0
    %273 = vmatprep.subr.bf16.mxu0 0
    %274 = vmatpush1.bf16.msra.mxu0 0
    %275 = vmatprep.subr.bf16.mxu0 0
    %276 = vmatpush1.bf16.msra.mxu0 0
    %277 = vmatprep.subr.bf16.mxu0 0
    %278 = vmatpush1.bf16.msra.mxu0 0
    %279 = vmatprep.subr.bf16.mxu0 0
    %280 = vmatpush1.bf16.msra.mxu0 0
    %281 = vmatprep.subr.bf16.mxu0 0
    %282 = vmatpush1.bf16.msra.mxu0 0
    %283 = vmatprep.subr.bf16.mxu0 0
    %284 = vmatpush1.bf16.msra.mxu0 0
    %285 = vmatprep.subr.bf16.mxu0 0
    %286 = vmatpush1.bf16.msra.mxu0 0
    %287 = vmatprep.mubr.bf16.mxu0 0
    %288 = vmatmul.mubr.bf16.gmra.mrb[0].mxu0 %v191
    %v289 = vpop.f32.mrb[0].mxu0
    %v290 = vadd.f32 %v242, %v289
    %v291 = vpop.f32.mrb[0].mxu0
    %v292 = vpop.f32.mrb[0].mxu0
    %v293 = vadd.f32 %v242, %v292
    %v294 = vpop.f32.mrb[0].mxu0
    %295 = vdwg.mxu0
    %v296 = vld [vmem:[#allocation5 + $0x30] sm:$0xf]
    %v297 = vld [vmem:[#allocation5 + $0x34] sm:$0xf]
    %v298 = vld [vmem:[#allocation5 + $0x38] sm:$0xf]
    %v299 = vld [vmem:[#allocation5 + $0x3c] sm:$0xf]
    %v300 = vld [vmem:[#allocation2 + $0x24] sm:$0x1]
    %v301 = vlaneseq
    %v302 = vshrl.u32 %v301, 7
    %v303 = vsub.s32 0, %v302
    %v304 = vrot.slane %v300, %v303
    %v309 = vunpack.c.l.b16 %v296
    %v310 = vunpack.c.l.b16 %v297
    %v311 = vunpack.c.l.b16 %v298
    %v312 = vunpack.c.l.b16 %v299
    %v313 = vpack.c.b16 %v310, %v309
    %v314 = vpack.c.b16 %v312, %v311
    %317 = vmatprep.subr.bf16.mxu0 0
    %318 = vmatpush1.bf16.msra.mxu0 %v313
    %319 = vmatprep.subr.bf16.mxu0 0
    %320 = vmatpush1.bf16.msra.mxu0 %v314
    %321 = vmatprep.subr.bf16.mxu0 0
    %322 = vmatpush1.bf16.msra.mxu0 0
    %323 = vmatprep.subr.bf16.mxu0 0
    %324 = vmatpush1.bf16.msra.mxu0 0
    %325 = vmatprep.subr.bf16.mxu0 0
    %326 = vmatpush1.bf16.msra.mxu0 0
    %327 = vmatprep.subr.bf16.mxu0 0
    %328 = vmatpush1.bf16.msra.mxu0 0
    %329 = vmatprep.subr.bf16.mxu0 0
    %330 = vmatpush1.bf16.msra.mxu0 0
    %331 = vmatprep.subr.bf16.mxu0 0
    %332 = vmatpush1.bf16.msra.mxu0 0
    %333 = vmatprep.subr.bf16.mxu0 0
    %334 = vmatpush1.bf16.msra.mxu0 0
    %335 = vmatprep.subr.bf16.mxu0 0
    %336 = vmatpush1.bf16.msra.mxu0 0
    %337 = vmatprep.subr.bf16.mxu0 0
    %338 = vmatpush1.bf16.msra.mxu0 0
    %339 = vmatprep.subr.bf16.mxu0 0
    %340 = vmatpush1.bf16.msra.mxu0 0
    %341 = vmatprep.subr.bf16.mxu0 0
    %342 = vmatpush1.bf16.msra.mxu0 0
    %343 = vmatprep.subr.bf16.mxu0 0
    %344 = vmatpush1.bf16.msra.mxu0 0
    %345 = vmatprep.subr.bf16.mxu0 0
    %346 = vmatpush1.bf16.msra.mxu0 0
    %347 = vmatprep.subr.bf16.mxu0 0
    %348 = vmatpush1.bf16.msra.mxu0 0
    %349 = vmatprep.mubr.bf16.mxu0 0
    %350 = vmatmul.mubr.bf16.gmra.mrb[0].mxu0 %v191
    %v351 = vpop.f32.mrb[0].mxu0
    %v352 = vadd.f32 %v304, %v351
    %v353 = vpop.f32.mrb[0].mxu0
    %v354 = vpop.f32.mrb[0].mxu0
    %v355 = vadd.f32 %v304, %v354
    %v356 = vpop.f32.mrb[0].mxu0
    %357 = vdwg.mxu0
    %v358 = vld [vmem:[%s1] sm:$0x1]
    %v359 = vld [vmem:[#allocation2 + $0x10] sm:$0xff]
    %v360 = vld [vmem:[#allocation2 + $0x18] sm:$0xff]
    %v361 = vsub.f32 %v358, 1.0
    %v362 = vmul.f32 %v361, 1e+09
    %v364 = vlaneseq
    %v365 = vshrl.u32 %v364, 7
    %v366 = vsub.s32 0, %v365
    %v367 = vrot.slane %v362, %v366
    %v369 = vadd.f32 %v359, %v367
    %v370 = vadd.f32 %v360, %v367
    %v371 = vpack.c.bf16 %v231, %v228
    %v372 = vpack.c.bf16 %v293, %v290
    %v374 = vsel %vm82, %v371, 0
    %v377 = vsel %vm82, %v372, 0
    %379 = vmatprep.subr.bf16.mxu0 0
    %380 = vmatpush1.bf16.xpose.msra.mxu0 %v377
    %381 = vmatprep.subr.bf16.mxu0 0
    %382 = vmatpush1.bf16.xpose.msra.mxu0 0
    %383 = vmatprep.subr.bf16.mxu0 0
    %384 = vmatpush1.bf16.xpose.msra.mxu0 0
    %385 = vmatprep.subr.bf16.mxu0 0
    %386 = vmatpush1.bf16.xpose.msra.mxu0 0
    %387 = vmatprep.subr.bf16.mxu0 0
    %388 = vmatpush1.bf16.xpose.msra.mxu0 0
    %389 = vmatprep.subr.bf16.mxu0 0
    %390 = vmatpush1.bf16.xpose.msra.mxu0 0
    %391 = vmatprep.subr.bf16.mxu0 0
    %392 = vmatpush1.bf16.xpose.msra.mxu0 0
    %393 = vmatprep.subr.bf16.mxu0 0
    %394 = vmatpush1.bf16.xpose.msra.mxu0 0
    %395 = vmatprep.subr.bf16.mxu0 0
    %396 = vmatpush1.bf16.xpose.msra.mxu0 0
    %397 = vmatprep.subr.bf16.mxu0 0
    %398 = vmatpush1.bf16.xpose.msra.mxu0 0
    %399 = vmatprep.subr.bf16.mxu0 0
    %400 = vmatpush1.bf16.xpose.msra.mxu0 0
    %401 = vmatprep.subr.bf16.mxu0 0
    %402 = vmatpush1.bf16.xpose.msra.mxu0 0
    %403 = vmatprep.subr.bf16.mxu0 0
    %404 = vmatpush1.bf16.xpose.msra.mxu0 0
    %405 = vmatprep.subr.bf16.mxu0 0
    %406 = vmatpush1.bf16.xpose.msra.mxu0 0
    %407 = vmatprep.subr.bf16.mxu0 0
    %408 = vmatpush1.bf16.xpose.msra.mxu0 0
    %409 = vmatprep.subr.bf16.mxu0 0
    %410 = vmatpush1.bf16.xpose.msra.mxu0 0
    %411 = vmatprep.mubr.bf16.mxu0 0
    %412 = vmatmul.mubr.bf16.gmra.mrb[0].mxu0 %v374
    %v413 = vpop.f32.mrb[0].mxu0
    %v414 = vadd.f32 0.0, %v413
    %v415 = vpop.f32.mrb[0].mxu0
    %v416 = vpop.f32.mrb[0].mxu0
    %v417 = vadd.f32 0.0, %v416
    %v418 = vpop.f32.mrb[0].mxu0
    %419 = vdwg.mxu0
    %v420 = vmul.f32 %v414, 0.17677669
    %v421 = vmul.f32 %v417, 0.17677669
    %v422 = vadd.f32 %v420, %v369
    %v423 = vadd.f32 %v421, %v370
    %vm424 = vcmask 130048
    %v425 = vsel %vm424, %v422, -inf
    %426 = vmax.xlane.f32.xlu0 %v425
    %v427 = vpop.xlane.xlu0 %426
    %v428 = vsel %vm424, %v423, -inf
    %429 = vmax.xlane.f32.xlu0 %v428
    %v430 = vpop.xlane.xlu0 %429
    %v431 = vsub.f32 %v422, %v427
    %v432 = vsub.f32 %v423, %v430
    %v433 = vmul.f32 %v431, 1.442695
    %v434 = vpow.pop %v433
    %v435 = vmul.f32 %v432, 1.442695
    %v436 = vpow.pop %v435
    %v437 = vsel %vm424, %v434, 0.0
    %438 = vadd.xlane.f32.xlu0 %v437
    %v439 = vpop.xlane.xlu0 %438
    %v440 = vsel %vm424, %v436, 0.0
    %441 = vadd.xlane.f32.xlu0 %v440
    %v442 = vpop.xlane.xlu0 %441
    %v443 = vrcp.pop %v439
    %v444 = vrcp.pop %v442
    %v445 = vmul.f32 %v434, %v443
    %v446 = vmul.f32 %v436, %v444
    %v447 = vpack.c.bf16 %v446, %v445
    %v448 = vpack.c.bf16 %v355, %v352
    %v450 = vsel %vm424, %v447, 0
    %452 = vmatprep.subr.bf16.mxu0 0
    %453 = vmatpush1.bf16.msra.mxu0 %v448
    %454 = vmatprep.subr.bf16.mxu0 0
    %455 = vmatpush1.bf16.msra.mxu0 0
    %456 = vmatprep.subr.bf16.mxu0 0
    %457 = vmatpush1.bf16.msra.mxu0 0
    %458 = vmatprep.subr.bf16.mxu0 0
    %459 = vmatpush1.bf16.msra.mxu0 0
    %460 = vmatprep.subr.bf16.mxu0 0
    %461 = vmatpush1.bf16.msra.mxu0 0
    %462 = vmatprep.subr.bf16.mxu0 0
    %463 = vmatpush1.bf16.msra.mxu0 0
    %464 = vmatprep.subr.bf16.mxu0 0
    %465 = vmatpush1.bf16.msra.mxu0 0
    %466 = vmatprep.subr.bf16.mxu0 0
    %467 = vmatpush1.bf16.msra.mxu0 0
    %468 = vmatprep.subr.bf16.mxu0 0
    %469 = vmatpush1.bf16.msra.mxu0 0
    %470 = vmatprep.subr.bf16.mxu0 0
    %471 = vmatpush1.bf16.msra.mxu0 0
    %472 = vmatprep.subr.bf16.mxu0 0
    %473 = vmatpush1.bf16.msra.mxu0 0
    %474 = vmatprep.subr.bf16.mxu0 0
    %475 = vmatpush1.bf16.msra.mxu0 0
    %476 = vmatprep.subr.bf16.mxu0 0
    %477 = vmatpush1.bf16.msra.mxu0 0
    %478 = vmatprep.subr.bf16.mxu0 0
    %479 = vmatpush1.bf16.msra.mxu0 0
    %480 = vmatprep.subr.bf16.mxu0 0
    %481 = vmatpush1.bf16.msra.mxu0 0
    %482 = vmatprep.subr.bf16.mxu0 0
    %483 = vmatpush1.bf16.msra.mxu0 0
    %484 = vmatprep.mubr.bf16.mxu0 0
    %485 = vmatmul.mubr.bf16.gmra.mrb[0].mxu0 %v450
    %v486 = vpop.f32.mrb[0].mxu0
    %v487 = vadd.f32 0.0, %v486
    %v488 = vpop.f32.mrb[0].mxu0
    %v489 = vpop.f32.mrb[0].mxu0
    %v490 = vadd.f32 0.0, %v489
    %v491 = vpop.f32.mrb[0].mxu0
    %492 = vdwg.mxu0
    %v493 = vpack.c.bf16 %v490, %v487
    %v494 = vld [vmem:[#allocation5 + $0x40] sm:$0xf]
    %v495 = vld [vmem:[#allocation5 + $0x44] sm:$0xf]
    %v496 = vld [vmem:[#allocation5 + $0x48] sm:$0xf]
    %v497 = vld [vmem:[#allocation5 + $0x4c] sm:$0xf]
    %v498 = vld [vmem:[#allocation2 + $0x25] sm:$0x1]
    %v499 = vlaneseq
    %v500 = vshrl.u32 %v499, 7
    %v501 = vsub.s32 0, %v500
    %v502 = vrot.slane %v498, %v501
    %v507 = vunpack.c.l.b16 %v494
    %v508 = vunpack.c.l.b16 %v495
    %v509 = vunpack.c.l.b16 %v496
    %v510 = vunpack.c.l.b16 %v497
    %v511 = vpack.c.b16 %v508, %v507
    %v512 = vpack.c.b16 %v510, %v509
    %v516 = vsel %vm82, %v493, 0
    %518 = vmatprep.subr.bf16.mxu0 0
    %519 = vmatpush1.bf16.msra.mxu0 %v511
    %520 = vmatprep.subr.bf16.mxu0 0
    %521 = vmatpush1.bf16.msra.mxu0 %v512
    %522 = vmatprep.subr.bf16.mxu0 0
    %523 = vmatpush1.bf16.msra.mxu0 0
    %524 = vmatprep.subr.bf16.mxu0 0
    %525 = vmatpush1.bf16.msra.mxu0 0
    %526 = vmatprep.subr.bf16.mxu0 0
    %527 = vmatpush1.bf16.msra.mxu0 0
    %528 = vmatprep.subr.bf16.mxu0 0
    %529 = vmatpush1.bf16.msra.mxu0 0
    %530 = vmatprep.subr.bf16.mxu0 0
    %531 = vmatpush1.bf16.msra.mxu0 0
    %532 = vmatprep.subr.bf16.mxu0 0
    %533 = vmatpush1.bf16.msra.mxu0 0
    %534 = vmatprep.subr.bf16.mxu0 0
    %535 = vmatpush1.bf16.msra.mxu0 0
    %536 = vmatprep.subr.bf16.mxu0 0
    %537 = vmatpush1.bf16.msra.mxu0 0
    %538 = vmatprep.subr.bf16.mxu0 0
    %539 = vmatpush1.bf16.msra.mxu0 0
    %540 = vmatprep.subr.bf16.mxu0 0
    %541 = vmatpush1.bf16.msra.mxu0 0
    %542 = vmatprep.subr.bf16.mxu0 0
    %543 = vmatpush1.bf16.msra.mxu0 0
    %544 = vmatprep.subr.bf16.mxu0 0
    %545 = vmatpush1.bf16.msra.mxu0 0
    %546 = vmatprep.subr.bf16.mxu0 0
    %547 = vmatpush1.bf16.msra.mxu0 0
    %548 = vmatprep.subr.bf16.mxu0 0
    %549 = vmatpush1.bf16.msra.mxu0 0
    %550 = vmatprep.mubr.bf16.mxu0 0
    %551 = vmatmul.mubr.bf16.gmra.mrb[0].mxu0 %v516
    %v552 = vpop.f32.mrb[0].mxu0
    %v553 = vadd.f32 %v502, %v552
    %v554 = vpop.f32.mrb[0].mxu0
    %v555 = vpop.f32.mrb[0].mxu0
    %v556 = vadd.f32 %v502, %v555
    %v557 = vpop.f32.mrb[0].mxu0
    %558 = vdwg.mxu0
    %v559 = vadd.f32 %v166, %v553
    %v560 = vadd.f32 %v167, %v556
    %v561 = vsel %vm82, %v559, 0.0
    %562 = vadd.xlane.f32.xlu0 %v561
    %v563 = vpop.xlane.xlu0 %562
    %v564 = vsel %vm82, %v560, 0.0
    %565 = vadd.xlane.f32.xlu0 %v564
    %v566 = vpop.xlane.xlu0 %565
    %v567 = vmul.f32 %v563, %v133
    %v568 = vmul.f32 %v566, %v133
    %v569 = vsub.f32 %v559, %v567
    %v570 = vsub.f32 %v560, %v568
    %v571 = vmul.f32 %v569, %v569
    %v572 = vmul.f32 %v570, %v570
    %v573 = vsel %vm82, %v571, 0.0
    %574 = vadd.xlane.f32.xlu0 %v573
    %v575 = vpop.xlane.xlu0 %574
    %v576 = vsel %vm82, %v572, 0.0
    %577 = vadd.xlane.f32.xlu0 %v576
    %v578 = vpop.xlane.xlu0 %577
    %v579 = vmul.f32 %v575, %v133
    %v580 = vmul.f32 %v578, %v133
    %v581 = vadd.f32 %v579, 1e-12
    %v582 = vadd.f32 %v580, 1e-12
    %v583 = vrsqrt.pop %v581
    %v584 = vrsqrt.pop %v582
    %v585 = vmul.f32 %v569, %v583
    %v586 = vmul.f32 %v570, %v584
    %v587 = vld [vmem:[#allocation2 + $0x26] sm:$0x1]
    %v588 = vlaneseq
    %v589 = vshrl.u32 %v588, 7
    %v590 = vsub.s32 0, %v589
    %v591 = vrot.slane %v587, %v590
    %v592 = vmul.f32 %v585, %v591
    %v593 = vmul.f32 %v586, %v591
    %v594 = vld [vmem:[#allocation2 + $0x27] sm:$0x1]
    %v595 = vlaneseq
    %v596 = vshrl.u32 %v595, 7
    %v597 = vsub.s32 0, %v596
    %v598 = vrot.slane %v594, %v597
    %v599 = vadd.f32 %v592, %v598
    %v600 = vadd.f32 %v593, %v598
    %v601 = vpack.c.bf16 %v600, %v599
    %v602 = vld [vmem:[#allocation5 + $0x50] sm:$0xf]
    %v603 = vld [vmem:[#allocation5 + $0x54] sm:$0xf]
    %v604 = vld [vmem:[#allocation5 + $0x58] sm:$0xf]
    %v605 = vld [vmem:[#allocation5 + $0x5c] sm:$0xf]
    %v606 = vld [vmem:[#allocation2 + $0x28] sm:$0x1]
    %v607 = vlaneseq
    %v608 = vshrl.u32 %v607, 7
    %v609 = vsub.s32 0, %v608
    %v610 = vrot.slane %v606, %v609
    %v615 = vunpack.c.l.b16 %v602
    %v616 = vunpack.c.l.b16 %v603
    %v617 = vunpack.c.l.b16 %v604
    %v618 = vunpack.c.l.b16 %v605
    %v619 = vpack.c.b16 %v616, %v615
    %v620 = vpack.c.b16 %v618, %v617
    %v624 = vsel %vm82, %v601, 0
    %626 = vmatprep.subr.bf16.mxu0 0
    %627 = vmatpush1.bf16.msra.mxu0 %v619
    %628 = vmatprep.subr.bf16.mxu0 0
    %629 = vmatpush1.bf16.msra.mxu0 %v620
    %630 = vmatprep.subr.bf16.mxu0 0
    %631 = vmatpush1.bf16.msra.mxu0 0
    %632 = vmatprep.subr.bf16.mxu0 0
    %633 = vmatpush1.bf16.msra.mxu0 0
    %634 = vmatprep.subr.bf16.mxu0 0
    %635 = vmatpush1.bf16.msra.mxu0 0
    %636 = vmatprep.subr.bf16.mxu0 0
    %637 = vmatpush1.bf16.msra.mxu0 0
    %638 = vmatprep.subr.bf16.mxu0 0
    %639 = vmatpush1.bf16.msra.mxu0 0
    %640 = vmatprep.subr.bf16.mxu0 0
    %641 = vmatpush1.bf16.msra.mxu0 0
    %642 = vmatprep.subr.bf16.mxu0 0
    %643 = vmatpush1.bf16.msra.mxu0 0
    %644 = vmatprep.subr.bf16.mxu0 0
    %645 = vmatpush1.bf16.msra.mxu0 0
    %646 = vmatprep.subr.bf16.mxu0 0
    %647 = vmatpush1.bf16.msra.mxu0 0
    %648 = vmatprep.subr.bf16.mxu0 0
    %649 = vmatpush1.bf16.msra.mxu0 0
    %650 = vmatprep.subr.bf16.mxu0 0
    %651 = vmatpush1.bf16.msra.mxu0 0
    %652 = vmatprep.subr.bf16.mxu0 0
    %653 = vmatpush1.bf16.msra.mxu0 0
    %654 = vmatprep.subr.bf16.mxu0 0
    %655 = vmatpush1.bf16.msra.mxu0 0
    %656 = vmatprep.subr.bf16.mxu0 0
    %657 = vmatpush1.bf16.msra.mxu0 0
    %658 = vmatprep.mubr.bf16.mxu0 0
    %659 = vmatmul.mubr.bf16.gmra.mrb[0].mxu0 %v624
    %v660 = vpop.f32.mrb[0].mxu0
    %v661 = vadd.f32 %v610, %v660
    %v662 = vpop.f32.mrb[0].mxu0
    %v663 = vpop.f32.mrb[0].mxu0
    %v664 = vadd.f32 %v610, %v663
    %v665 = vpop.f32.mrb[0].mxu0
    %666 = vdwg.mxu0
    %v667 = vmul.f32 %v661, %v661
    %v668 = vmul.f32 %v664, %v664
    %v669 = vmul.f32 %v661, %v667
    %v670 = vmul.f32 %v664, %v668
    %v671 = vmul.f32 %v669, 0.044715
    %v672 = vmul.f32 %v670, 0.044715
    %v673 = vadd.f32 %v661, %v671
    %v674 = vadd.f32 %v664, %v672
    %v675 = vmul.f32 %v673, 0.7978846
    %v676 = vmul.f32 %v674, 0.7978846
    %v677 = vtanh.pop %v675
    %v678 = vtanh.pop %v676
    %v679 = vadd.f32 %v677, 1.0
    %v680 = vadd.f32 %v678, 1.0
    %v681 = vmul.f32 %v679, 0.5
    %v682 = vmul.f32 %v680, 0.5
    %v683 = vmul.f32 %v661, %v681
    %v684 = vmul.f32 %v664, %v682
    %v685 = vpack.c.bf16 %v684, %v683
    %v686 = vld [vmem:[#allocation5 + $0x60] sm:$0xf]
    %v687 = vld [vmem:[#allocation5 + $0x64] sm:$0xf]
    %v688 = vld [vmem:[#allocation5 + $0x68] sm:$0xf]
    %v689 = vld [vmem:[#allocation5 + $0x6c] sm:$0xf]
    %v690 = vld [vmem:[#allocation5 + $0x70] sm:$0xf]
    %v691 = vld [vmem:[#allocation5 + $0x74] sm:$0xf]
    %v692 = vld [vmem:[#allocation5 + $0x78] sm:$0xf]
    %v693 = vld [vmem:[#allocation5 + $0x7c] sm:$0xf]
    %v694 = vld [vmem:[#allocation2 + $0x29] sm:$0x1]
    %v695 = vlaneseq
    %v696 = vshrl.u32 %v695, 7
    %v697 = vsub.s32 0, %v696
    %v698 = vrot.slane %v694, %v697
    %v707 = vunpack.c.l.b16 %v686
    %v708 = vunpack.c.l.b16 %v687
    %v709 = vunpack.c.l.b16 %v688
    %v710 = vunpack.c.l.b16 %v689
    %v711 = vunpack.c.l.b16 %v690
    %v712 = vunpack.c.l.b16 %v691
    %v713 = vunpack.c.l.b16 %v692
    %v714 = vunpack.c.l.b16 %v693
    %v715 = vpack.c.b16 %v708, %v707
    %v716 = vpack.c.b16 %v710, %v709
    %v717 = vpack.c.b16 %v712, %v711
    %v718 = vpack.c.b16 %v714, %v713
    %vm723 = vcmask 523264
    %v725 = vsel %vm723, %v685, 0
    %727 = vmatprep.subr.bf16.mxu0 0
    %728 = vmatpush1.bf16.msra.mxu0 %v715
    %729 = vmatprep.subr.bf16.mxu0 0
    %730 = vmatpush1.bf16.msra.mxu0 %v716
    %731 = vmatprep.subr.bf16.mxu0 0
    %732 = vmatpush1.bf16.msra.mxu0 %v717
    %733 = vmatprep.subr.bf16.mxu0 0
    %734 = vmatpush1.bf16.msra.mxu0 %v718
    %735 = vmatprep.subr.bf16.mxu0 0
    %736 = vmatpush1.bf16.msra.mxu0 0
    %737 = vmatprep.subr.bf16.mxu0 0
    %738 = vmatpush1.bf16.msra.mxu0 0
    %739 = vmatprep.subr.bf16.mxu0 0
    %740 = vmatpush1.bf16.msra.mxu0 0
    %741 = vmatprep.subr.bf16.mxu0 0
    %742 = vmatpush1.bf16.msra.mxu0 0
    %743 = vmatprep.subr.bf16.mxu0 0
    %744 = vmatpush1.bf16.msra.mxu0 0
    %745 = vmatprep.subr.bf16.mxu0 0
    %746 = vmatpush1.bf16.msra.mxu0 0
    %747 = vmatprep.subr.bf16.mxu0 0
    %748 = vmatpush1.bf16.msra.mxu0 0
    %749 = vmatprep.subr.bf16.mxu0 0
    %750 = vmatpush1.bf16.msra.mxu0 0
    %751 = vmatprep.subr.bf16.mxu0 0
    %752 = vmatpush1.bf16.msra.mxu0 0
    %753 = vmatprep.subr.bf16.mxu0 0
    %754 = vmatpush1.bf16.msra.mxu0 0
    %755 = vmatprep.subr.bf16.mxu0 0
    %756 = vmatpush1.bf16.msra.mxu0 0
    %757 = vmatprep.subr.bf16.mxu0 0
    %758 = vmatpush1.bf16.msra.mxu0 0
    %759 = vmatprep.mubr.bf16.mxu0 0
    %760 = vmatmul.mubr.bf16.gmra.mrb[0].mxu0 %v725
    %v761 = vpop.f32.mrb[0].mxu0
    %v762 = vadd.f32 %v698, %v761
    %v763 = vpop.f32.mrb[0].mxu0
    %v764 = vpop.f32.mrb[0].mxu0
    %v765 = vadd.f32 %v698, %v764
    %v766 = vpop.f32.mrb[0].mxu0
    %767 = vdwg.mxu0
    %v768 = vadd.f32 %v599, %v762
    %v769 = vadd.f32 %v600, %v765
    %v770 = vsel %vm82, %v768, 0.0
    %771 = vadd.xlane.f32.xlu0 %v770
    %v772 = vpop.xlane.xlu0 %771
    %v773 = vsel %vm82, %v769, 0.0
    %774 = vadd.xlane.f32.xlu0 %v773
    %v775 = vpop.xlane.xlu0 %774
    %v776 = vmul.f32 %v772, %v133
    %v777 = vmul.f32 %v775, %v133
    %v778 = vsub.f32 %v768, %v776
    %v779 = vsub.f32 %v769, %v777
    %v780 = vmul.f32 %v778, %v778
    %v781 = vmul.f32 %v779, %v779
    %v782 = vsel %vm82, %v780, 0.0
    %783 = vadd.xlane.f32.xlu0 %v782
    %v784 = vpop.xlane.xlu0 %783
    %v785 = vsel %vm82, %v781, 0.0
    %786 = vadd.xlane.f32.xlu0 %v785
    %v787 = vpop.xlane.xlu0 %786
    %v788 = vmul.f32 %v784, %v133
    %v789 = vmul.f32 %v787, %v133
    %v790 = vadd.f32 %v788, 1e-12
    %v791 = vadd.f32 %v789, 1e-12
    %v792 = vrsqrt.pop %v790
    %v793 = vrsqrt.pop %v791
    %v794 = vmul.f32 %v778, %v792
    %v795 = vmul.f32 %v779, %v793
    %v796 = vld [vmem:[#allocation2 + $0x2a] sm:$0x1]
    %v797 = vlaneseq
    %v798 = vshrl.u32 %v797, 7
    %v799 = vsub.s32 0, %v798
    %v800 = vrot.slane %v796, %v799
    %v801 = vmul.f32 %v794, %v800
    %v802 = vmul.f32 %v795, %v800
    %v803 = vld [vmem:[#allocation2 + $0x2b] sm:$0x1]
    %v804 = vlaneseq
    %v805 = vshrl.u32 %v804, 7
    %v806 = vsub.s32 0, %v805
    %v807 = vrot.slane %v803, %v806
    %v808 = vadd.f32 %v801, %v807
    %v809 = vadd.f32 %v802, %v807
    %v810 = vpack.c.bf16 %v809, %v808
    %v811 = vld [vmem:[#allocation5 + $0x80] sm:$0xf]
    %v812 = vld [vmem:[#allocation5 + $0x84] sm:$0xf]
    %v813 = vld [vmem:[#allocation5 + $0x88] sm:$0xf]
    %v814 = vld [vmem:[#allocation5 + $0x8c] sm:$0xf]
    %v815 = vld [vmem:[#allocation2 + $0x2c] sm:$0x1]
    %v816 = vlaneseq
    %v817 = vshrl.u32 %v816, 7
    %v818 = vsub.s32 0, %v817
    %v819 = vrot.slane %v815, %v818
    %v824 = vunpack.c.l.b16 %v811
    %v825 = vunpack.c.l.b16 %v812
    %v826 = vunpack.c.l.b16 %v813
    %v827 = vunpack.c.l.b16 %v814
    %v828 = vpack.c.b16 %v825, %v824
    %v829 = vpack.c.b16 %v827, %v826
    %v833 = vsel %vm82, %v810, 0
    %835 = vmatprep.subr.bf16.mxu0 0
    %836 = vmatpush1.bf16.msra.mxu0 %v828
    %837 = vmatprep.subr.bf16.mxu0 0
    %838 = vmatpush1.bf16.msra.mxu0 %v829
    %839 = vmatprep.subr.bf16.mxu0 0
    %840 = vmatpush1.bf16.msra.mxu0 0
    %841 = vmatprep.subr.bf16.mxu0 0
    %842 = vmatpush1.bf16.msra.mxu0 0
    %843 = vmatprep.subr.bf16.mxu0 0
    %844 = vmatpush1.bf16.msra.mxu0 0
    %845 = vmatprep.subr.bf16.mxu0 0
    %846 = vmatpush1.bf16.msra.mxu0 0
    %847 = vmatprep.subr.bf16.mxu0 0
    %848 = vmatpush1.bf16.msra.mxu0 0
    %849 = vmatprep.subr.bf16.mxu0 0
    %850 = vmatpush1.bf16.msra.mxu0 0
    %851 = vmatprep.subr.bf16.mxu0 0
    %852 = vmatpush1.bf16.msra.mxu0 0
    %853 = vmatprep.subr.bf16.mxu0 0
    %854 = vmatpush1.bf16.msra.mxu0 0
    %855 = vmatprep.subr.bf16.mxu0 0
    %856 = vmatpush1.bf16.msra.mxu0 0
    %857 = vmatprep.subr.bf16.mxu0 0
    %858 = vmatpush1.bf16.msra.mxu0 0
    %859 = vmatprep.subr.bf16.mxu0 0
    %860 = vmatpush1.bf16.msra.mxu0 0
    %861 = vmatprep.subr.bf16.mxu0 0
    %862 = vmatpush1.bf16.msra.mxu0 0
    %863 = vmatprep.subr.bf16.mxu0 0
    %864 = vmatpush1.bf16.msra.mxu0 0
    %865 = vmatprep.subr.bf16.mxu0 0
    %866 = vmatpush1.bf16.msra.mxu0 0
    %867 = vmatprep.mubr.bf16.mxu0 0
    %868 = vmatmul.mubr.bf16.gmra.mrb[0].mxu0 %v833
    %v869 = vpop.f32.mrb[0].mxu0
    %v870 = vadd.f32 %v819, %v869
    %v871 = vpop.f32.mrb[0].mxu0
    %v872 = vpop.f32.mrb[0].mxu0
    %v873 = vadd.f32 %v819, %v872
    %v874 = vpop.f32.mrb[0].mxu0
    %875 = vdwg.mxu0
    %v876 = vmul.f32 %v870, %v870
    %v877 = vmul.f32 %v873, %v873
    %v878 = vmul.f32 %v870, %v876
    %v879 = vmul.f32 %v873, %v877
    %v880 = vmul.f32 %v878, 0.044715
    %v881 = vmul.f32 %v879, 0.044715
    %v882 = vadd.f32 %v870, %v880
    %v883 = vadd.f32 %v873, %v881
    %v884 = vmul.f32 %v882, 0.7978846
    %v885 = vmul.f32 %v883, 0.7978846
    %v886 = vtanh.pop %v884
    %v887 = vtanh.pop %v885
    %v888 = vadd.f32 %v886, 1.0
    %v889 = vadd.f32 %v887, 1.0
    %v890 = vmul.f32 %v888, 0.5
    %v891 = vmul.f32 %v889, 0.5
    %v892 = vmul.f32 %v870, %v890
    %v893 = vmul.f32 %v873, %v891
    %v894 = vpack.c.bf16 %v893, %v892
    %v895 = vld [vmem:[#allocation5 + $0x90] sm:$0xf]
    %v896 = vld [vmem:[#allocation5 + $0x94] sm:$0xf]
    %v897 = vld [vmem:[#allocation5 + $0x98] sm:$0xf]
    %v898 = vld [vmem:[#allocation5 + $0x9c] sm:$0xf]
    %v899 = vld [vmem:[#allocation2 + $0x2d] sm:$0x1]
    %v900 = vlaneseq
    %v901 = vshrl.u32 %v900, 7
    %v902 = vsub.s32 0, %v901
    %v903 = vrot.slane %v899, %v902
    %v908 = vunpack.c.l.b16 %v895
    %v909 = vunpack.c.l.b16 %v896
    %v910 = vunpack.c.l.b16 %v897
    %v911 = vunpack.c.l.b16 %v898
    %v912 = vpack.c.b16 %v909, %v908
    %v913 = vpack.c.b16 %v911, %v910
    %v917 = vsel %vm82, %v894, 0
    %919 = vmatprep.subr.bf16.mxu0 0
    %920 = vmatpush1.bf16.msra.mxu0 %v912
    %921 = vmatprep.subr.bf16.mxu0 0
    %922 = vmatpush1.bf16.msra.mxu0 %v913
    %923 = vmatprep.subr.bf16.mxu0 0
    %924 = vmatpush1.bf16.msra.mxu0 0
    %925 = vmatprep.subr.bf16.mxu0 0
    %926 = vmatpush1.bf16.msra.mxu0 0
    %927 = vmatprep.subr.bf16.mxu0 0
    %928 = vmatpush1.bf16.msra.mxu0 0
    %929 = vmatprep.subr.bf16.mxu0 0
    %930 = vmatpush1.bf16.msra.mxu0 0
    %931 = vmatprep.subr.bf16.mxu0 0
    %932 = vmatpush1.bf16.msra.mxu0 0
    %933 = vmatprep.subr.bf16.mxu0 0
    %934 = vmatpush1.bf16.msra.mxu0 0
    %935 = vmatprep.subr.bf16.mxu0 0
    %936 = vmatpush1.bf16.msra.mxu0 0
    %937 = vmatprep.subr.bf16.mxu0 0
    %938 = vmatpush1.bf16.msra.mxu0 0
    %939 = vmatprep.subr.bf16.mxu0 0
    %940 = vmatpush1.bf16.msra.mxu0 0
    %941 = vmatprep.subr.bf16.mxu0 0
    %942 = vmatpush1.bf16.msra.mxu0 0
    %943 = vmatprep.subr.bf16.mxu0 0
    %944 = vmatpush1.bf16.msra.mxu0 0
    %945 = vmatprep.subr.bf16.mxu0 0
    %946 = vmatpush1.bf16.msra.mxu0 0
    %947 = vmatprep.subr.bf16.mxu0 0
    %948 = vmatpush1.bf16.msra.mxu0 0
    %949 = vmatprep.subr.bf16.mxu0 0
    %950 = vmatpush1.bf16.msra.mxu0 0
    %951 = vmatprep.mubr.bf16.mxu0 0
    %952 = vmatmul.mubr.bf16.gmra.mrb[0].mxu0 %v917
    %v953 = vpop.f32.mrb[0].mxu0
    %v954 = vadd.f32 %v903, %v953
    %v955 = vpop.f32.mrb[0].mxu0
    %v956 = vpop.f32.mrb[0].mxu0
    %v957 = vadd.f32 %v903, %v956
    %v958 = vpop.f32.mrb[0].mxu0
    %959 = vdwg.mxu0
    %960 = vst [vmem:[#allocation7] sm:$0x1] %v954
    %961 = vst [vmem:[#allocation7 + $0x1] sm:$0x1] %v957
    // Predicated region
    $region26: #{tpu_custom_call.1} parent=1 // pred_check
      _
    $region27: #{tpu_custom_call.1} parent=1 // pred_check_branch
      %963 = sbr.rel (0) target = $region29
    $region28: #{tpu_custom_call.1} parent=1 // pred_region
      %s965 = ssub.s32 32, 32
      %966 = vsyncadd [#allocation4], %s965
      %s968 = sshll.u32 [#allocation7], 4
      %s969 = int_to_ptr.vmem [resolvable:$true] %s968
      %971 = dma.vmem_to_hbm [thread:$0]  %s969, 32, %s4, [#allocation4]
    $region29: #{tpu_custom_call.1} parent=1 // pred_fallthru
      _
    // Predicated region
    $region30: #{tpu_custom_call.1} parent=1 // pred_check
      _
    $region31: #{tpu_custom_call.1} parent=1 // pred_check_branch
      %973 = sbr.rel (0) target = $region33
    $region32: #{tpu_custom_call.1} parent=1 // pred_region
      %974 = dma.done [#allocation4], 32
    $region33: #{tpu_custom_call.1} parent=1 // pred_fallthru
      _
    %975 = vsyncpa [#allocation3], 1
    %976 = vsyncpa [#allocation6], 1
    %977 = vsyncpa [#allocation4], 1

</llo_original>
